<compile_context>
chip_gen: v7x
topology: tpu7x:2x2x1
jax: 0.10.0
libtpu: 0.0.40
codegen_flags: <defaults>
</compile_context>

<pallas_src>
import functools

import jax
import jax.numpy as jnp
import numpy as np
from jax import lax
from jax.experimental import pallas as pl
from jax.experimental.pallas import tpu as pltpu

PROJ_LIST = (8, 32, 128)
BIG = 1e30  # finite sentinel that sorts masked-out rows to the end
VMEM_LIMIT = 48 * 1024 * 1024


def _dot_t(x, w):
    """x @ w.T, contracting the last dim of both, f32 accumulation (MXU)."""
    return lax.dot_general(x, w, (((1,), (1,)), ((), ())),
                           preferred_element_type=jnp.float32)


def _pick_t_tile(T):
    for cand in (512, 256, 128):
        if T % cand == 0:
            return cand
    return T


def _pick_tb(B, T, P):
    """Batch rows per Kernel-B step: ~8 MiB per block, divisor of B."""
    per_row = 2 * T * P * 4
    tb = int(max(1, min(B, (8 * 1024 * 1024) // max(per_row, 1))))
    while B % tb:
        tb -= 1
    return tb


# ----------------------------------------------------------------------------
# Kernel A: random projections + sentinel fill + masked pooling
#   grid = (B, T // tT);  B "parallel", T "arbitrary" (pooling accumulators)
# ----------------------------------------------------------------------------
def _proj_pool_kernel(h_ref, m0_ref, m1_ref, v_ref,
                      ab_ref, cls_ref, dm_ref,
                      sum_acc, cnt_acc):
    t = pl.program_id(1)

    Hin = h_ref[0]                              # (tT, D) native dtype
    Hf = Hin.astype(jnp.float32)                # full-precision pooling path
    m0 = m0_ref[0]                              # (tT, 1) f32
    m1 = m1_ref[0]                              # (tT, 1) f32

    # lane-dense bf16 MXU matmul (cast in VMEM only), f32 accumulation
    proj = _dot_t(Hin.astype(jnp.bfloat16),
                  v_ref[0].astype(jnp.bfloat16))          # (tT, P) f32
    ab_ref[0, 0] = jnp.where(m0 > 0.0, proj, BIG)
    ab_ref[0, 1] = jnp.where(m1 > 0.0, proj, BIG)

    # init accumulators / cls at the first T tile of each batch row
    @pl.when(t == 0)
    def _():
        sum_acc[...] = jnp.zeros_like(sum_acc)
        cnt_acc[...] = jnp.zeros_like(cnt_acc)
        cls_ref[0] = Hf[0:1, :]

    # masked segment pooling, accumulated across T tiles (f32)
    sum_acc[0:1, :] = sum_acc[0:1, :] + jnp.sum(Hf * m0, axis=0, keepdims=True)
    sum_acc[1:2, :] = sum_acc[1:2, :] + jnp.sum(Hf * m1, axis=0, keepdims=True)
    cnt_acc[0:1, :] = cnt_acc[0:1, :] + jnp.sum(m0, axis=0, keepdims=True)
    cnt_acc[1:2, :] = cnt_acc[1:2, :] + jnp.sum(m1, axis=0, keepdims=True)

    @pl.when(t == pl.num_programs(1) - 1)
    def _():
        c0 = jnp.maximum(cnt_acc[0:1, :], 1.0)
        c1 = jnp.maximum(cnt_acc[1:2, :], 1.0)
        dm_ref[0] = sum_acc[0:1, :] / c0 - sum_acc[1:2, :] / c1


def proj_pool(H, m0e, m1e, V):
    B, T, D = H.shape
    P = V.shape[1]
    tT = _pick_t_tile(T)
    nT = T // tT
    return pl.pallas_call(
        _proj_pool_kernel,
        out_shape=(jax.ShapeDtypeStruct((B, 2, T, P), jnp.float32),
                   jax.ShapeDtypeStruct((B, 1, D), jnp.float32),
                   jax.ShapeDtypeStruct((B, 1, D), jnp.float32)),
        grid=(B, nT),
        in_specs=[pl.BlockSpec((1, tT, D), lambda b, t: (b, t, 0)),
                  pl.BlockSpec((1, tT, 1), lambda b, t: (b, t, 0)),
                  pl.BlockSpec((1, tT, 1), lambda b, t: (b, t, 0)),
                  pl.BlockSpec((1, P, D), lambda b, t: (b, 0, 0))],
        out_specs=(pl.BlockSpec((1, 2, tT, P), lambda b, t: (b, 0, t, 0)),
                   pl.BlockSpec((1, 1, D), lambda b, t: (b, 0, 0)),
                   pl.BlockSpec((1, 1, D), lambda b, t: (b, 0, 0))),
        scratch_shapes=[pltpu.VMEM((2, D), jnp.float32),
                        pltpu.VMEM((2, 1), jnp.float32)],
        compiler_params=pltpu.CompilerParams(
            dimension_semantics=("parallel", "arbitrary"),
            vmem_limit_bytes=VMEM_LIMIT),
    )(H, m0e, m1e, V)


# ----------------------------------------------------------------------------
# Kernel B: W1 reduction (all groups) + gated fusion + LayerNorm + classifier
#   grid = (B // tb,); tb batch rows per step ("parallel")
# ----------------------------------------------------------------------------
def _w1_head_kernel(xy_ref, m_ref, cls_ref, dm_ref, gm_ref, np_ref,
                    w_ref, b_ref, gate_ref, lng_ref, lnb_ref, wcls_ref,
                    bcls_ref, o_ref, *, content_dim, d_model):
    tb, _, T, P = xy_ref.shape
    xp = xy_ref[:, 0, :, :]               # (tb, T, P)  sorted along T
    yp = xy_ref[:, 1, :, :]
    m = m_ref[...]                        # (tb, 1, 1)  min(count0, count1)

    # quantile-matched W1, all three projection groups at once
    row = lax.broadcasted_iota(jnp.float32, (T, P), 0)
    diff = jnp.where(row[None, :, :] < m, jnp.abs(xp - yp), 0.0)
    colsum = jnp.sum(diff, axis=1)                               # (tb, P)
    sums = _dot_t(colsum, gm_ref[...])                           # (tb, 3)
    denom = jnp.maximum(m[:, 0, :] * np_ref[...], 1.0)           # (tb, 3)
    d_ot = sums / denom

    # content / style projections with row-stacked weight + single gate
    cls = cls_ref[:, 0, :]                # (tb, D)
    dm = dm_ref[:, 0, :]                  # (tb, D)
    W = w_ref[...]                        # (CS, 2D)
    CS = W.shape[0]
    cs = _dot_t(cls, W[:, :d_model]) + _dot_t(dm, W[:, d_model:]) + b_ref[...]
    g = 1.0 / (1.0 + jnp.exp(-gate_ref[...]))                    # (1, 1)
    col = lax.broadcasted_iota(jnp.float32, (1, CS), 1)
    fused = cs * jnp.where(col < float(content_dim), 1.0 - g, g)  # (tb, CS)

    # LayerNorm over [fused, d_ot] (kept split to avoid a lane concat)
    Ftot = float(CS + 3)
    mu = (jnp.sum(fused, axis=1, keepdims=True)
          + jnp.sum(d_ot, axis=1, keepdims=True)) / Ftot
    c1 = fused - mu
    c2 = d_ot - mu
    var = (jnp.sum(c1 * c1, axis=1, keepdims=True)
           + jnp.sum(c2 * c2, axis=1, keepdims=True)) / Ftot
    r = lax.rsqrt(var + 1e-5)
    lng = lng_ref[...]
    lnb = lnb_ref[...]
    wcls = wcls_ref[...]
    y1 = c1 * r * lng[:, :CS] + lnb[:, :CS]
    y2 = c2 * r * lng[:, CS:] + lnb[:, CS:]
    out = (_dot_t(y1, wcls[:, :CS]) + _dot_t(y2, wcls[:, CS:])
           + bcls_ref[...])                                       # (tb, 2)
    o_ref[...] = out[:, None, :]


def w1_head(xy, m, cls_v, dmean, gm, nproj, wstack, bstack, gate,
            ln_g, ln_b, wcls, bcls, *, content_dim, d_model):
    B, _, T, P = xy.shape
    n_out = wcls.shape[0]
    tb = _pick_tb(B, T, P)
    bcast = lambda i: (0, 0)
    return pl.pallas_call(
        functools.partial(_w1_head_kernel,
                          content_dim=content_dim, d_model=d_model),
        out_shape=jax.ShapeDtypeStruct((B, 1, n_out), jnp.float32),
        grid=(B // tb,),
        in_specs=[pl.BlockSpec((tb, 2, T, P), lambda i: (i, 0, 0, 0)),
                  pl.BlockSpec((tb, 1, 1), lambda i: (i, 0, 0)),
                  pl.BlockSpec((tb, 1, d_model), lambda i: (i, 0, 0)),
                  pl.BlockSpec((tb, 1, d_model), lambda i: (i, 0, 0)),
                  pl.BlockSpec(gm.shape, bcast),
                  pl.BlockSpec(nproj.shape, bcast),
                  pl.BlockSpec(wstack.shape, bcast),
                  pl.BlockSpec(bstack.shape, bcast),
                  pl.BlockSpec(gate.shape, bcast),
                  pl.BlockSpec(ln_g.shape, bcast),
                  pl.BlockSpec(ln_b.shape, bcast),
                  pl.BlockSpec(wcls.shape, bcast),
                  pl.BlockSpec(bcls.shape, bcast)],
        out_specs=pl.BlockSpec((tb, 1, n_out), lambda i: (i, 0, 0)),
        compiler_params=pltpu.CompilerParams(
            dimension_semantics=("parallel",),
            vmem_limit_bytes=VMEM_LIMIT),
    )(xy, m, cls_v, dmean, gm, nproj, wstack, bstack, gate, ln_g, ln_b,
      wcls, bcls)


# ----------------------------------------------------------------------------
# Full forward (Pallas kernels + thin JAX glue)
# ----------------------------------------------------------------------------
def forward(H, token_type_ids, attention_mask, params, rng):
    B, T, D = H.shape
    m0 = ((token_type_ids == 0) & (attention_mask == 1)).astype(jnp.float32)
    m1 = ((token_type_ids == 1) & (attention_mask == 1)).astype(jnp.float32)

    # merged random projection directions (per group, per batch), no padding
    keys = jax.random.split(rng, len(PROJ_LIST))
    v_groups = []
    for key, n_proj in zip(keys, PROJ_LIST):
        V = jax.random.normal(key, (B, n_proj, D), dtype=jnp.float32)
        v_groups.append(V / jnp.linalg.norm(V, axis=2, keepdims=True))
    V_all = jnp.concatenate(v_groups, axis=1)              # (B, 168, D) f32
    P_real = V_all.shape[1]

    # H stays at native dtype; bf16 cast for the MXU happens inside Kernel A
    abP, cls_v, dmean = proj_pool(H, m0[:, :, None], m1[:, :, None], V_all)

    # TODO(synk): per-column sort has no clean Pallas/Mosaic lowering; single
    # XLA sort over both sides at once, on the unpadded 168 columns.
    xy_sorted = jnp.sort(abP, axis=2)                       # (B, 2, T, 168)

    m = jnp.minimum(jnp.sum(m0, axis=1),
                    jnp.sum(m1, axis=1)).reshape(B, 1, 1)

    # per-group column masks and group sizes (static)
    gm_np = np.zeros((len(PROJ_LIST), P_real), np.float32)
    off = 0
    for g, n in enumerate(PROJ_LIST):
        gm_np[g, off:off + n] = 1.0
        off += n
    gm = jnp.asarray(gm_np)
    nproj = jnp.asarray([[float(p) for p in PROJ_LIST]], dtype=jnp.float32)

    wstack = jnp.concatenate([params["wc"], params["ws"]], axis=0)
    bstack = jnp.concatenate([params["bc"], params["bs"]], axis=1)

    logits = w1_head(xy_sorted, m, cls_v, dmean, gm, nproj, wstack, bstack,
                     params["gate"], params["ln_g"], params["ln_b"],
                     params["wcls"], params["bcls"],
                     content_dim=params["wc"].shape[0], d_model=D)
    return logits[:, 0, :]


# ----------------------------------------------------------------------------
# Pure-JAX reference (mirrors the PyTorch forward semantics)
# ----------------------------------------------------------------------------
def reference_forward(H, token_type_ids, attention_mask, params, rng):
    B, T, D = H.shape
    m0 = ((token_type_ids == 0) & (attention_mask == 1)).astype(jnp.float32)
    m1 = ((token_type_ids == 1) & (attention_mask == 1)).astype(jnp.float32)
    cls = H[:, 0, :]

    def mmean(mask):
        return (jnp.sum(H * mask[:, :, None], axis=1)
                / jnp.maximum(jnp.sum(mask, axis=1, keepdims=True), 1.0))

    rep = jnp.concatenate([cls, mmean(m0) - mmean(m1)], axis=1)
    C = rep @ params["wc"].T + params["bc"]
    S = rep @ params["ws"].T + params["bs"]
    g = jax.nn.sigmoid(params["gate"])
    fused = jnp.concatenate([C * (1.0 - g), S * g], axis=1)

    keys = jax.random.split(rng, len(PROJ_LIST))
    cols = []
    for key, n_proj in zip(keys, PROJ_LIST):
        V = jax.random.normal(key, (B, n_proj, D), dtype=jnp.float32)
        V = V / jnp.linalg.norm(V, axis=2, keepdims=True)
        per_b = []
        for b in range(B):
            proj = H[b] @ V[b].T
            aP = jnp.where(m0[b][:, None] > 0, proj, BIG)
            bP = jnp.where(m1[b][:, None] > 0, proj, BIG)
            xp = jnp.sort(aP, axis=0)
            yp = jnp.sort(bP, axis=0)
            mm = jnp.minimum(jnp.sum(m0[b]), jnp.sum(m1[b]))
            valid = jnp.arange(T, dtype=jnp.float32)[:, None] < mm
            s = jnp.sum(jnp.where(valid, jnp.abs(xp - yp), 0.0))
            per_b.append(s / jnp.maximum(mm * n_proj, 1.0))
        cols.append(jnp.stack(per_b))
    d_ot = jnp.stack(cols, axis=1)

    feat = jnp.concatenate([fused, d_ot], axis=1)
    mu = jnp.mean(feat, axis=1, keepdims=True)
    var = jnp.mean((feat - mu) ** 2, axis=1, keepdims=True)
    y = (feat - mu) / jnp.sqrt(var + 1e-5) * params["ln_g"] + params["ln_b"]
    return y @ params["wcls"].T + params["bcls"]


# ----------------------------------------------------------------------------
# Deterministic parameter init (shapes follow OTStyleModel.__init__)
# ----------------------------------------------------------------------------
def init_params(key, hidden, content_dim, style_dim):
    ks = jax.random.split(key, 6)
    hidden2 = 2 * hidden
    F = content_dim + style_dim + 3
    return dict(
        wc=0.05 * jax.random.normal(ks[0], (content_dim, hidden2), jnp.float32),
        bc=0.01 * jax.random.normal(ks[1], (1, content_dim), jnp.float32),
        ws=0.05 * jax.random.normal(ks[2], (style_dim, hidden2), jnp.float32),
        bs=0.01 * jax.random.normal(ks[3], (1, style_dim), jnp.float32),
        gate=jnp.full((1, 1), 0.5, jnp.float32),            # nn.Parameter([0.5])
        ln_g=jnp.ones((1, F), jnp.float32),                 # LayerNorm weight
        ln_b=jnp.zeros((1, F), jnp.float32),                 # LayerNorm bias
        wcls=0.05 * jax.random.normal(ks[4], (2, F), jnp.float32),
        bcls=0.01 * jax.random.normal(ks[5], (1, 2), jnp.float32),
    )


if __name__ == "__main__":
    # TODO(synk): the HuggingFace tokenizer + DeBERTa encoder have no Pallas
    # equivalent; we start from synthetic encoder outputs (H, token_type_ids,
    # attention_mask) of matching shapes.
    key = jax.random.PRNGKey(0)
    k_h, k_p, k_v = jax.random.split(key, 3)

    B, T, D = 2, 16, 32            # batch, seq, hidden_size (small synthetic)
    content_dim, style_dim = 16, 16

    H = jax.random.normal(k_h, (B, T, D), jnp.float32)
    t_idx = jnp.arange(T)
    token_type_ids = jnp.stack([(t_idx >= 8).astype(jnp.int32),
                                (t_idx >= 6).astype(jnp.int32)])
    attention_mask = jnp.stack([jnp.ones((T,), jnp.int32),
                                (t_idx < 13).astype(jnp.int32)])

    params = init_params(k_p, D, content_dim, style_dim)

    logits = forward(H, token_type_ids, attention_mask, params, k_v)
    logits = jax.block_until_ready(logits)

    ref = reference_forward(H, token_type_ids, attention_mask, params, k_v)
    np.testing.assert_allclose(np.asarray(logits), np.asarray(ref),
                               rtol=5e-2, atol=5e-2)
    print("KERNEL_OK")
</pallas_src>

<mosaic_0001>
module attributes {stable_mosaic.version = 11 : i64} {
  func.func @_proj_pool_kernel(%arg0: i32, %arg1: i32, %arg2: memref<1x16x32xf32, #tpu.memory_space<vmem>>, %arg3: memref<1x16x1xf32, #tpu.memory_space<vmem>>, %arg4: memref<1x16x1xf32, #tpu.memory_space<vmem>>, %arg5: memref<1x168x32xf32, #tpu.memory_space<vmem>>, %arg6: memref<1x2x16x168xf32, #tpu.memory_space<vmem>>, %arg7: memref<1x1x32xf32, #tpu.memory_space<vmem>>, %arg8: memref<1x1x32xf32, #tpu.memory_space<vmem>>, %arg9: memref<2x32xf32, #tpu.memory_space<vmem>>, %arg10: memref<2x1xf32, #tpu.memory_space<vmem>>) attributes {dimension_semantics = [#tpu.dimension_semantics<parallel>, #tpu.dimension_semantics<arbitrary>], iteration_bounds = array<i64: 2, 1>, scalar_prefetch = 0 : i64, scratch_operands = 2 : i64, tpu.core_type = #tpu.core_type<tc>, window_params = [{transform_indices = @transform_0, window_bounds = array<i64: 1, 16, 32>}, {transform_indices = @transform_1, window_bounds = array<i64: 1, 16, 1>}, {transform_indices = @transform_2, window_bounds = array<i64: 1, 16, 1>}, {transform_indices = @transform_3, window_bounds = array<i64: 1, 168, 32>}, {transform_indices = @transform_4, window_bounds = array<i64: 1, 2, 16, 168>}, {transform_indices = @transform_5, window_bounds = array<i64: 1, 1, 32>}, {transform_indices = @transform_6, window_bounds = array<i64: 1, 1, 32>}]} {
    %c0 = arith.constant 0 : index
    %c0_0 = arith.constant 0 : index
    %c0_1 = arith.constant 0 : index
    %0 = vector.load %arg2[%c0, %c0_0, %c0_1] : memref<1x16x32xf32, #tpu.memory_space<vmem>>, vector<1x16x32xf32>
    %1 = vector.shape_cast %0 : vector<1x16x32xf32> to vector<16x32xf32>
    %c0_2 = arith.constant 0 : index
    %c0_3 = arith.constant 0 : index
    %c0_4 = arith.constant 0 : index
    %2 = vector.load %arg3[%c0_2, %c0_3, %c0_4] : memref<1x16x1xf32, #tpu.memory_space<vmem>>, vector<1x16x1xf32>
    %3 = vector.shape_cast %2 : vector<1x16x1xf32> to vector<16x1xf32>
    %c0_5 = arith.constant 0 : index
    %c0_6 = arith.constant 0 : index
    %c0_7 = arith.constant 0 : index
    %4 = vector.load %arg4[%c0_5, %c0_6, %c0_7] : memref<1x16x1xf32, #tpu.memory_space<vmem>>, vector<1x16x1xf32>
    %5 = vector.shape_cast %4 : vector<1x16x1xf32> to vector<16x1xf32>
    %6 = arith.truncf %1 : vector<16x32xf32> to vector<16x32xbf16>
    %c0_8 = arith.constant 0 : index
    %c0_9 = arith.constant 0 : index
    %c0_10 = arith.constant 0 : index
    %7 = vector.load %arg5[%c0_8, %c0_9, %c0_10] : memref<1x168x32xf32, #tpu.memory_space<vmem>>, vector<1x168x32xf32>
    %8 = vector.shape_cast %7 : vector<1x168x32xf32> to vector<168x32xf32>
    %9 = arith.truncf %8 : vector<168x32xf32> to vector<168x32xbf16>
    %cst = arith.constant dense<0.000000e+00> : vector<16x168xf32>
    %10 = tpu.matmul %6, %9, %cst {dimension_numbers = #tpu.dot_dimension_numbers<[1], [1], [0], [0], [0, 0, 1, 0], [], []>} : vector<16x32xbf16>, vector<168x32xbf16>, vector<16x168xf32> -> vector<16x168xf32>
    %cst_11 = arith.constant 0.000000e+00 : f32
    %11 = vector.broadcast %cst_11 : f32 to vector<16x1xf32>
    %12 = arith.cmpf ogt, %3, %11 : vector<16x1xf32>
    %cst_12 = arith.constant 1.000000e+30 : f32
    %13 = vector.shape_cast %12 : vector<16x1xi1> to vector<16x1xi1>
    %14 = vector.broadcast %13 : vector<16x1xi1> to vector<16x168xi1>
    %15 = vector.broadcast %cst_12 : f32 to vector<16x168xf32>
    %16 = arith.select %14, %10, %15 : vector<16x168xi1>, vector<16x168xf32>
    %c0_13 = arith.constant 0 : index
    %c0_14 = arith.constant 0 : index
    %c0_15 = arith.constant 0 : index
    %c0_16 = arith.constant 0 : index
    %17 = vector.load %arg6[%c0_13, %c0_14, %c0_15, %c0_16] : memref<1x2x16x168xf32, #tpu.memory_space<vmem>>, vector<1x1x16x168xf32>
    %18 = vector.shape_cast %17 : vector<1x1x16x168xf32> to vector<16x168xf32>
    %19 = vector.shape_cast %16 : vector<16x168xf32> to vector<1x1x16x168xf32>
    tpu.vector_store %arg6[%c0_13, %c0_14, %c0_15, %c0_16], %19 {strides = array<i32>} : memref<1x2x16x168xf32, #tpu.memory_space<vmem>>, vector<1x1x16x168xf32>,
    %cst_17 = arith.constant 0.000000e+00 : f32
    %20 = vector.broadcast %cst_17 : f32 to vector<16x1xf32>
    %21 = arith.cmpf ogt, %5, %20 : vector<16x1xf32>
    %cst_18 = arith.constant 1.000000e+30 : f32
    %22 = vector.shape_cast %21 : vector<16x1xi1> to vector<16x1xi1>
    %23 = vector.broadcast %22 : vector<16x1xi1> to vector<16x168xi1>
    %24 = vector.broadcast %cst_18 : f32 to vector<16x168xf32>
    %25 = arith.select %23, %10, %24 : vector<16x168xi1>, vector<16x168xf32>
    %c0_19 = arith.constant 0 : index
    %c1 = arith.constant 1 : index
    %c0_20 = arith.constant 0 : index
    %c0_21 = arith.constant 0 : index
    %26 = vector.load %arg6[%c0_19, %c1, %c0_20, %c0_21] : memref<1x2x16x168xf32, #tpu.memory_space<vmem>>, vector<1x1x16x168xf32>
    %27 = vector.shape_cast %26 : vector<1x1x16x168xf32> to vector<16x168xf32>
    %28 = vector.shape_cast %25 : vector<16x168xf32> to vector<1x1x16x168xf32>
    tpu.vector_store %arg6[%c0_19, %c1, %c0_20, %c0_21], %28 {strides = array<i32>} : memref<1x2x16x168xf32, #tpu.memory_space<vmem>>, vector<1x1x16x168xf32>,
    %c0_i32 = arith.constant 0 : i32
    %29 = arith.cmpi eq, %arg1, %c0_i32 : i32
    %30 = arith.extui %29 : i1 to i32
    %c0_i32_22 = arith.constant 0 : i32
    %31 = arith.cmpi ne, %30, %c0_i32_22 : i32
    scf.if %31 {
      %cst_45 = arith.constant 0.000000e+00 : f32
      %59 = vector.broadcast %cst_45 : f32 to vector<2x32xf32>
      %c0_46 = arith.constant 0 : index
      %c0_47 = arith.constant 0 : index
      %60 = vector.load %arg9[%c0_46, %c0_47] : memref<2x32xf32, #tpu.memory_space<vmem>>, vector<2x32xf32>
      tpu.vector_store %arg9[%c0_46, %c0_47], %59 {strides = array<i32>} : memref<2x32xf32, #tpu.memory_space<vmem>>, vector<2x32xf32>,
      %cst_48 = arith.constant 0.000000e+00 : f32
      %61 = vector.broadcast %cst_48 : f32 to vector<2x1xf32>
      %c0_49 = arith.constant 0 : index
      %c0_50 = arith.constant 0 : index
      %62 = vector.load %arg10[%c0_49, %c0_50] : memref<2x1xf32, #tpu.memory_space<vmem>>, vector<2x1xf32>
      tpu.vector_store %arg10[%c0_49, %c0_50], %61 {strides = array<i32>} : memref<2x1xf32, #tpu.memory_space<vmem>>, vector<2x1xf32>,
      %63 = vector.extract_strided_slice %1 {offsets = [0, 0], sizes = [1, 32], strides = [1, 1]} : vector<16x32xf32> to vector<1x32xf32>
      %c0_51 = arith.constant 0 : index
      %c0_52 = arith.constant 0 : index
      %c0_53 = arith.constant 0 : index
      %64 = vector.load %arg7[%c0_51, %c0_52, %c0_53] : memref<1x1x32xf32, #tpu.memory_space<vmem>>, vector<1x1x32xf32>
      %65 = vector.shape_cast %64 : vector<1x1x32xf32> to vector<1x32xf32>
      %66 = vector.shape_cast %63 : vector<1x32xf32> to vector<1x1x32xf32>
      tpu.vector_store %arg7[%c0_51, %c0_52, %c0_53], %66 {strides = array<i32>} : memref<1x1x32xf32, #tpu.memory_space<vmem>>, vector<1x1x32xf32>,
    } else {
    }
    %c0_23 = arith.constant 0 : index
    %c0_24 = arith.constant 0 : index
    %32 = vector.load %arg9[%c0_23, %c0_24] : memref<2x32xf32, #tpu.memory_space<vmem>>, vector<1x32xf32>
    %33 = vector.broadcast %3 : vector<16x1xf32> to vector<16x32xf32>
    %34 = arith.mulf %1, %33 : vector<16x32xf32>
    %cst_25 = arith.constant dense<0.000000e+00> : vector<32xf32>
    %35 = vector.multi_reduction <add>, %34, %cst_25 [0] : vector<16x32xf32> to vector<32xf32>
    %36 = vector.shape_cast %35 : vector<32xf32> to vector<1x32xf32>
    %37 = arith.addf %32, %36 : vector<1x32xf32>
    %c0_26 = arith.constant 0 : index
    %c0_27 = arith.constant 0 : index
    %38 = vector.load %arg9[%c0_26, %c0_27] : memref<2x32xf32, #tpu.memory_space<vmem>>, vector<1x32xf32>
    tpu.vector_store %arg9[%c0_26, %c0_27], %37 {strides = array<i32>} : memref<2x32xf32, #tpu.memory_space<vmem>>, vector<1x32xf32>,
    %c1_28 = arith.constant 1 : index
    %c0_29 = arith.constant 0 : index
    %39 = vector.load %arg9[%c1_28, %c0_29] : memref<2x32xf32, #tpu.memory_space<vmem>>, vector<1x32xf32>
    %40 = vector.broadcast %5 : vector<16x1xf32> to vector<16x32xf32>
    %41 = arith.mulf %1, %40 : vector<16x32xf32>
    %cst_30 = arith.constant dense<0.000000e+00> : vector<32xf32>
    %42 = vector.multi_reduction <add>, %41, %cst_30 [0] : vector<16x32xf32> to vector<32xf32>
    %43 = vector.shape_cast %42 : vector<32xf32> to vector<1x32xf32>
    %44 = arith.addf %39, %43 : vector<1x32xf32>
    %c1_31 = arith.constant 1 : index
    %c0_32 = arith.constant 0 : index
    %45 = vector.load %arg9[%c1_31, %c0_32] : memref<2x32xf32, #tpu.memory_space<vmem>>, vector<1x32xf32>
    tpu.vector_store %arg9[%c1_31, %c0_32], %44 {strides = array<i32>} : memref<2x32xf32, #tpu.memory_space<vmem>>, vector<1x32xf32>,
    %c0_33 = arith.constant 0 : index
    %c0_34 = arith.constant 0 : index
    %46 = vector.load %arg10[%c0_33, %c0_34] : memref<2x1xf32, #tpu.memory_space<vmem>>, vector<1x1xf32>
    %cst_35 = arith.constant dense<0.000000e+00> : vector<1xf32>
    %47 = vector.multi_reduction <add>, %3, %cst_35 [0] : vector<16x1xf32> to vector<1xf32>
    %48 = vector.shape_cast %47 : vector<1xf32> to vector<1x1xf32>
    %49 = arith.addf %46, %48 : vector<1x1xf32>
    %c0_36 = arith.constant 0 : index
    %c0_37 = arith.constant 0 : index
    %50 = vector.load %arg10[%c0_36, %c0_37] : memref<2x1xf32, #tpu.memory_space<vmem>>, vector<1x1xf32>
    tpu.vector_store %arg10[%c0_36, %c0_37], %49 {strides = array<i32>} : memref<2x1xf32, #tpu.memory_space<vmem>>, vector<1x1xf32>,
    %c1_38 = arith.constant 1 : index
    %c0_39 = arith.constant 0 : index
    %51 = vector.load %arg10[%c1_38, %c0_39] : memref<2x1xf32, #tpu.memory_space<vmem>>, vector<1x1xf32>
    %cst_40 = arith.constant dense<0.000000e+00> : vector<1xf32>
    %52 = vector.multi_reduction <add>, %5, %cst_40 [0] : vector<16x1xf32> to vector<1xf32>
    %53 = vector.shape_cast %52 : vector<1xf32> to vector<1x1xf32>
    %54 = arith.addf %51, %53 : vector<1x1xf32>
    %c1_41 = arith.constant 1 : index
    %c0_42 = arith.constant 0 : index
    %55 = vector.load %arg10[%c1_41, %c0_42] : memref<2x1xf32, #tpu.memory_space<vmem>>, vector<1x1xf32>
    tpu.vector_store %arg10[%c1_41, %c0_42], %54 {strides = array<i32>} : memref<2x1xf32, #tpu.memory_space<vmem>>, vector<1x1xf32>,
    %c0_i32_43 = arith.constant 0 : i32
    %56 = arith.cmpi eq, %arg1, %c0_i32_43 : i32
    %57 = arith.extui %56 : i1 to i32
    %c0_i32_44 = arith.constant 0 : i32
    %58 = arith.cmpi ne, %57, %c0_i32_44 : i32
    scf.if %58 {
      %c0_45 = arith.constant 0 : index
      %c0_46 = arith.constant 0 : index
      %59 = vector.load %arg10[%c0_45, %c0_46] : memref<2x1xf32, #tpu.memory_space<vmem>>, vector<1x1xf32>
      %cst_47 = arith.constant 1.000000e+00 : f32
      %60 = vector.broadcast %cst_47 : f32 to vector<1x1xf32>
      %61 = arith.maximumf %59, %60 : vector<1x1xf32>
      %c1_48 = arith.constant 1 : index
      %c0_49 = arith.constant 0 : index
      %62 = vector.load %arg10[%c1_48, %c0_49] : memref<2x1xf32, #tpu.memory_space<vmem>>, vector<1x1xf32>
      %cst_50 = arith.constant 1.000000e+00 : f32
      %63 = vector.broadcast %cst_50 : f32 to vector<1x1xf32>
      %64 = arith.maximumf %62, %63 : vector<1x1xf32>
      %c0_51 = arith.constant 0 : index
      %c0_52 = arith.constant 0 : index
      %65 = vector.load %arg9[%c0_51, %c0_52] : memref<2x32xf32, #tpu.memory_space<vmem>>, vector<1x32xf32>
      %66 = vector.broadcast %61 : vector<1x1xf32> to vector<1x32xf32>
      %67 = arith.divf %65, %66 : vector<1x32xf32>
      %c1_53 = arith.constant 1 : index
      %c0_54 = arith.constant 0 : index
      %68 = vector.load %arg9[%c1_53, %c0_54] : memref<2x32xf32, #tpu.memory_space<vmem>>, vector<1x32xf32>
      %69 = vector.broadcast %64 : vector<1x1xf32> to vector<1x32xf32>
      %70 = arith.divf %68, %69 : vector<1x32xf32>
      %71 = arith.subf %67, %70 : vector<1x32xf32>
      %c0_55 = arith.constant 0 : index
      %c0_56 = arith.constant 0 : index
      %c0_57 = arith.constant 0 : index
      %72 = vector.load %arg8[%c0_55, %c0_56, %c0_57] : memref<1x1x32xf32, #tpu.memory_space<vmem>>, vector<1x1x32xf32>
      %73 = vector.shape_cast %72 : vector<1x1x32xf32> to vector<1x32xf32>
      %74 = vector.shape_cast %71 : vector<1x32xf32> to vector<1x1x32xf32>
      tpu.vector_store %arg8[%c0_55, %c0_56, %c0_57], %74 {strides = array<i32>} : memref<1x1x32xf32, #tpu.memory_space<vmem>>, vector<1x1x32xf32>,
    } else {
    }
    return
  }
  func.func @transform_0(%arg0: i32, %arg1: i32) -> (i32, i32, i32) {
    %c0_i32 = arith.constant 0 : i32
    %c0_i32_0 = arith.constant 0 : i32
    return %arg0, %arg1, %c0_i32 : i32, i32, i32
  }
  func.func @transform_1(%arg0: i32, %arg1: i32) -> (i32, i32, i32) {
    %c0_i32 = arith.constant 0 : i32
    %c0_i32_0 = arith.constant 0 : i32
    return %arg0, %arg1, %c0_i32 : i32, i32, i32
  }
  func.func @transform_2(%arg0: i32, %arg1: i32) -> (i32, i32, i32) {
    %c0_i32 = arith.constant 0 : i32
    %c0_i32_0 = arith.constant 0 : i32
    return %arg0, %arg1, %c0_i32 : i32, i32, i32
  }
  func.func @transform_3(%arg0: i32, %arg1: i32) -> (i32, i32, i32) {
    %c0_i32 = arith.constant 0 : i32
    %c0_i32_0 = arith.constant 0 : i32
    %c0_i32_1 = arith.constant 0 : i32
    return %arg0, %c0_i32, %c0_i32_0 : i32, i32, i32
  }
  func.func @transform_4(%arg0: i32, %arg1: i32) -> (i32, i32, i32, i32) {
    %c0_i32 = arith.constant 0 : i32
    %c0_i32_0 = arith.constant 0 : i32
    %c0_i32_1 = arith.constant 0 : i32
    return %arg0, %c0_i32, %arg1, %c0_i32_0 : i32, i32, i32, i32
  }
  func.func @transform_5(%arg0: i32, %arg1: i32) -> (i32, i32, i32) {
    %c0_i32 = arith.constant 0 : i32
    %c0_i32_0 = arith.constant 0 : i32
    %c0_i32_1 = arith.constant 0 : i32
    return %arg0, %c0_i32, %c0_i32_0 : i32, i32, i32
  }
  func.func @transform_6(%arg0: i32, %arg1: i32) -> (i32, i32, i32) {
    %c0_i32 = arith.constant 0 : i32
    %c0_i32_0 = arith.constant 0 : i32
    %c0_i32_1 = arith.constant 0 : i32
    return %arg0, %c0_i32, %c0_i32_0 : i32, i32, i32
  }
}

</mosaic_0001>

<llo_original>
// kernel: tpu_custom_call.1
$region0: #{tpu_custom_call.1}
  #allocation0 [shape = 'u32[]', space=smem, size = 0x4, offset = 0x4, fixed_abs, tag = 'smem constant byte address 0x4 - core index']
  #allocation1 [shape = 'u32[144,128]{1,0:T(1,128)}', space=vmem, size = 0x12000, scoped, tag = 'internal scratch']
  #allocation2 [shape = 'f32[2,32]{1,0:T(2,128)}', space=vmem, size = 0x400, scoped, tag = 'scratch operand']
  #allocation3 [shape = 'f32[2,1]{1,0:T(2,128)}', space=vmem, size = 0x400, scoped, tag = 'scratch operand']
  %s0 = inlined_call_operand.vmem [shape: f32[2,16,32], index: 0, kind: input, shape index: {}]
  %s1 = inlined_call_operand.vmem [shape: f32[2,16,1], index: 1, kind: input, shape index: {}]
  %s2 = inlined_call_operand.vmem [shape: f32[2,16,1], index: 2, kind: input, shape index: {}]
  %s3 = inlined_call_operand.vmem [shape: f32[2,168,32], index: 3, kind: input, shape index: {}]
  %s4 = inlined_call_operand.hbm [shape: f32[2,2,16,168], index: 4, kind: output, shape index: {0}]
  %s5 = inlined_call_operand.hbm [shape: f32[2,1,32], index: 5, kind: output, shape index: {1}]
  %s6 = inlined_call_operand.hbm [shape: f32[2,1,32], index: 6, kind: output, shape index: {2}]
  %7 = xla_tuple %s4, %s5, %s6
  %s8 = sld [smem:[#allocation0]]
  $region73: #{tpu_custom_call.1} parent=0
    _
  %s10 = ssub.s32 1, %s8
  %s11 = scalar_select 0, %s10, %s8
  $region1: #{tpu_custom_call.1} parent=0
    #allocation4 [shape = 'u8[65536]{0}', space=vmem, size = 0x10000, scoped, tag = 'output window, operand 0']
    #allocation5 [shape = 's32[2]{0}', space=sflag, size = 0x8, scoped, tag = 'scoped memory for tpu_custom_call.1']
    #allocation6 [shape = 'u8[1024]{0}', space=vmem, size = 0x400, scoped, tag = 'output window, operand 1']
    #allocation7 [shape = 's32[2]{0}', space=sflag, size = 0x8, scoped, tag = 'scoped memory for tpu_custom_call.1']
    #allocation8 [shape = 'u8[1024]{0}', space=vmem, size = 0x400, scoped, tag = 'output window, operand 2']
    %12 = vsyncpa [#allocation5], 0
    %s13 = scalar_lea.sflag [#allocation5], 1
    %14 = vsyncpa %s13, 0
    %15 = vsyncpa [#allocation7], 0
    %s16 = scalar_lea.sflag [#allocation7], 1
    %17 = vsyncpa %s16, 0
    loop: start=0, step=1, limit=4
    $region2: #{tpu_custom_call.1} parent=1 // loop_pre_header
      _
    $region3: #{tpu_custom_call.1} parent=1 // loop_header
      %s19 = sphi 0, %s23
      %p20 = scmp.ge.s32.totalorder %s19, 4
      %s26 = sphi 0, %s38
      %s27 = sphi 0, %s34
      %s28 = sphi 0, %s26
      %s29 = sphi 0, %s27
      %s30 = sphi 0, %s28
      %s31 = sphi 0, %s29
      %s43 = sphi 0, %s45
      %s46 = sphi 0, %s43
      %s47 = sphi 0, %s46
      %s63 = sphi 0, %s47
      %s71 = sphi 0, %s73
      %s74 = sphi 0, %s71
      %s75 = sphi 0, %s74
      %s91 = sphi 0, %s75
      %s99 = sphi 0, %s101
      %s102 = sphi 0, %s99
      %s103 = sphi 0, %s102
      %s119 = sphi 0, %s103
      %s125 = sphi 0, %s127
      %s128 = sphi 0, %s125
      %s129 = sphi 0, %s128
      %s145 = sphi 0, %s129
      %s153 = sphi 0, %s155
      %s156 = sphi 0, %s153
      %s157 = sphi 0, %s156
      %s173 = sphi 0, %s157
      %s179 = sphi 0, %s181
      %s182 = sphi 0, %s179
      %s183 = sphi 0, %s182
      %s199 = sphi 0, %s183
      %s205 = sphi 0, %s207
      %s208 = sphi 0, %s205
      %s209 = sphi 0, %s208
      %s225 = sphi 0, %s209
    $region4: #{tpu_custom_call.1} parent=1 // loop_header_branch
      %22 = sbr.rel (%p20) target = $region8
    $region5: #{tpu_custom_call.1} parent=1 // loop_body
      %s24 = ssub.s32 %s19, 1
      %s25 = ssub.s32 %s19, 2
      %s32 = sadd.s32 1, %s27
      %p33 = scmp.ge.s32.totalorder %s32, 1
      %s34 = scalar_select %p33, 0, %s32
      %s35 = sadd.s32 1, %s26
      %s36 = scalar_select %p33, %s35, %s26
      %p37 = scmp.ge.s32.totalorder %s36, 2
      %s38 = scalar_select %p37, 0, %s36
      %s39 = ssub.s32 %s26, %s38
      %s40 = ssub.s32 %s27, %s34
      %s41 = sor.u32 %s39, %s40
      %p42 = scmp.eq.s32.totalorder %s41, 0
      %s44 = sadd.s32 %s43, 1
      %s45 = scalar_select %p42, %s43, %s44
      %p48 = pneg %p42
      %p49 = scmp.eq.s32.totalorder %s19, 1
      %p50 = por %p48, %p49
      %p51 = scmp.ne.s32.totalorder %s43, %s46
      %p52 = scmp.eq.s32.totalorder %s19, 0
      %p53 = por %p51, %p52
      %p54 = scmp.ne.s32.totalorder %s43, %s46
      %p55 = scmp.eq.s32.totalorder %s24, 1
      %p56 = por %p54, %p55
      %p57 = scmp.ne.s32.totalorder %s46, %s47
      %p58 = scmp.eq.s32.totalorder %s24, 0
      %p59 = por %p57, %p58
      %p60 = scmp.ne.s32.totalorder %s46, %s47
      %p61 = scmp.eq.s32.totalorder %s25, 1
      %p62 = por %p60, %p61
      %p64 = scmp.ne.s32.totalorder %s47, %s63
      %p65 = scmp.eq.s32.totalorder %s25, 0
      %p66 = por %p64, %p65
      %s67 = ssub.s32 %s26, %s38
      %s68 = ssub.s32 %s27, %s34
      %s69 = sor.u32 %s67, %s68
      %p70 = scmp.eq.s32.totalorder %s69, 0
      %s72 = sadd.s32 %s71, 1
      %s73 = scalar_select %p70, %s71, %s72
      %p76 = pneg %p70
      %p77 = scmp.eq.s32.totalorder %s19, 1
      %p78 = por %p76, %p77
      %p79 = scmp.ne.s32.totalorder %s71, %s74
      %p80 = scmp.eq.s32.totalorder %s19, 0
      %p81 = por %p79, %p80
      %p82 = scmp.ne.s32.totalorder %s71, %s74
      %p83 = scmp.eq.s32.totalorder %s24, 1
      %p84 = por %p82, %p83
      %p85 = scmp.ne.s32.totalorder %s74, %s75
      %p86 = scmp.eq.s32.totalorder %s24, 0
      %p87 = por %p85, %p86
      %p88 = scmp.ne.s32.totalorder %s74, %s75
      %p89 = scmp.eq.s32.totalorder %s25, 1
      %p90 = por %p88, %p89
      %p92 = scmp.ne.s32.totalorder %s75, %s91
      %p93 = scmp.eq.s32.totalorder %s25, 0
      %p94 = por %p92, %p93
      %s95 = ssub.s32 %s26, %s38
      %s96 = ssub.s32 %s27, %s34
      %s97 = sor.u32 %s95, %s96
      %p98 = scmp.eq.s32.totalorder %s97, 0
      %s100 = sadd.s32 %s99, 1
      %s101 = scalar_select %p98, %s99, %s100
      %p104 = pneg %p98
      %p105 = scmp.eq.s32.totalorder %s19, 1
      %p106 = por %p104, %p105
      %p107 = scmp.ne.s32.totalorder %s99, %s102
      %p108 = scmp.eq.s32.totalorder %s19, 0
      %p109 = por %p107, %p108
      %p110 = scmp.ne.s32.totalorder %s99, %s102
      %p111 = scmp.eq.s32.totalorder %s24, 1
      %p112 = por %p110, %p111
      %p113 = scmp.ne.s32.totalorder %s102, %s103
      %p114 = scmp.eq.s32.totalorder %s24, 0
      %p115 = por %p113, %p114
      %p116 = scmp.ne.s32.totalorder %s102, %s103
      %p117 = scmp.eq.s32.totalorder %s25, 1
      %p118 = por %p116, %p117
      %p120 = scmp.ne.s32.totalorder %s103, %s119
      %p121 = scmp.eq.s32.totalorder %s25, 0
      %p122 = por %p120, %p121
      %s123 = ssub.s32 %s26, %s38
      %p124 = scmp.eq.s32.totalorder %s123, 0
      %s126 = sadd.s32 %s125, 1
      %s127 = scalar_select %p124, %s125, %s126
      %p130 = pneg %p124
      %p131 = scmp.eq.s32.totalorder %s19, 1
      %p132 = por %p130, %p131
      %p133 = scmp.ne.s32.totalorder %s125, %s128
      %p134 = scmp.eq.s32.totalorder %s19, 0
      %p135 = por %p133, %p134
      %p136 = scmp.ne.s32.totalorder %s125, %s128
      %p137 = scmp.eq.s32.totalorder %s24, 1
      %p138 = por %p136, %p137
      %p139 = scmp.ne.s32.totalorder %s128, %s129
      %p140 = scmp.eq.s32.totalorder %s24, 0
      %p141 = por %p139, %p140
      %p142 = scmp.ne.s32.totalorder %s128, %s129
      %p143 = scmp.eq.s32.totalorder %s25, 1
      %p144 = por %p142, %p143
      %p146 = scmp.ne.s32.totalorder %s129, %s145
      %p147 = scmp.eq.s32.totalorder %s25, 0
      %p148 = por %p146, %p147
      %s149 = ssub.s32 %s26, %s38
      %s150 = ssub.s32 %s27, %s34
      %s151 = sor.u32 %s149, %s150
      %p152 = scmp.eq.s32.totalorder %s151, 0
      %s154 = sadd.s32 %s153, 1
      %s155 = scalar_select %p152, %s153, %s154
      %p158 = pneg %p152
      %p159 = scmp.eq.s32.totalorder %s19, 1
      %p160 = por %p158, %p159
      %p161 = scmp.ne.s32.totalorder %s153, %s156
      %p162 = scmp.eq.s32.totalorder %s19, 0
      %p163 = por %p161, %p162
      %p164 = scmp.ne.s32.totalorder %s153, %s156
      %p165 = scmp.eq.s32.totalorder %s24, 1
      %p166 = por %p164, %p165
      %p167 = scmp.ne.s32.totalorder %s156, %s157
      %p168 = scmp.eq.s32.totalorder %s24, 0
      %p169 = por %p167, %p168
      %p170 = scmp.ne.s32.totalorder %s156, %s157
      %p171 = scmp.eq.s32.totalorder %s25, 1
      %p172 = por %p170, %p171
      %p174 = scmp.ne.s32.totalorder %s157, %s173
      %p175 = scmp.eq.s32.totalorder %s25, 0
      %p176 = por %p174, %p175
      %s177 = ssub.s32 %s26, %s38
      %p178 = scmp.eq.s32.totalorder %s177, 0
      %s180 = sadd.s32 %s179, 1
      %s181 = scalar_select %p178, %s179, %s180
      %p184 = pneg %p178
      %p185 = scmp.eq.s32.totalorder %s19, 1
      %p186 = por %p184, %p185
      %p187 = scmp.ne.s32.totalorder %s179, %s182
      %p188 = scmp.eq.s32.totalorder %s19, 0
      %p189 = por %p187, %p188
      %p190 = scmp.ne.s32.totalorder %s179, %s182
      %p191 = scmp.eq.s32.totalorder %s24, 1
      %p192 = por %p190, %p191
      %p193 = scmp.ne.s32.totalorder %s182, %s183
      %p194 = scmp.eq.s32.totalorder %s24, 0
      %p195 = por %p193, %p194
      %p196 = scmp.ne.s32.totalorder %s182, %s183
      %p197 = scmp.eq.s32.totalorder %s25, 1
      %p198 = por %p196, %p197
      %p200 = scmp.ne.s32.totalorder %s183, %s199
      %p201 = scmp.eq.s32.totalorder %s25, 0
      %p202 = por %p200, %p201
      %s203 = ssub.s32 %s26, %s38
      %p204 = scmp.eq.s32.totalorder %s203, 0
      %s206 = sadd.s32 %s205, 1
      %s207 = scalar_select %p204, %s205, %s206
      %p210 = pneg %p204
      %p211 = scmp.eq.s32.totalorder %s19, 1
      %p212 = por %p210, %p211
      %p213 = scmp.ne.s32.totalorder %s205, %s208
      %p214 = scmp.eq.s32.totalorder %s19, 0
      %p215 = por %p213, %p214
      %p216 = scmp.ne.s32.totalorder %s205, %s208
      %p217 = scmp.eq.s32.totalorder %s24, 1
      %p218 = por %p216, %p217
      %p219 = scmp.ne.s32.totalorder %s208, %s209
      %p220 = scmp.eq.s32.totalorder %s24, 0
      %p221 = por %p219, %p220
      %p222 = scmp.ne.s32.totalorder %s208, %s209
      %p223 = scmp.eq.s32.totalorder %s25, 1
      %p224 = por %p222, %p223
      %p226 = scmp.ne.s32.totalorder %s209, %s225
      %p227 = scmp.eq.s32.totalorder %s25, 0
      %p228 = por %p226, %p227
      %p229 = scmp.le.s32.totalorder 1, %s19
      %p230 = scmp.lt.s32.totalorder %s19, 3
      %p231 = pnand %p229, %p230
      %p232 = pneg %p231
      // Predicated region
      $region9: #{tpu_custom_call.1} parent=5 // pred_check
        _
      $region10: #{tpu_custom_call.1} parent=5 // pred_check_branch
        %234 = sbr.rel (%p231) target = $region12
      $region11: #{tpu_custom_call.1} parent=5 // pred_region
        %s235 = ssub.s32 %s19, 1
      $region12: #{tpu_custom_call.1} parent=5 // pred_fallthru
        _
      %p236 = scmp.lt.s32.totalorder %s19, 2
      // Predicated region
      $region13: #{tpu_custom_call.1} parent=5 // pred_check
        %p237 = pneg %p236
      $region14: #{tpu_custom_call.1} parent=5 // pred_check_branch
        %239 = sbr.rel (%p237) target = $region16
      $region15: #{tpu_custom_call.1} parent=5 // pred_region
        // Predicated region
        $region17: #{tpu_custom_call.1} parent=15 // pred_check
          %p240 = pneg %p53
        $region18: #{tpu_custom_call.1} parent=15 // pred_check_branch
          %242 = sbr.rel (%p240) target = $region20
        $region19: #{tpu_custom_call.1} parent=15 // pred_region
          %s243 = smul.u32 2, %s27
          %p244 = scmp.lt.s32.totalorder %s26, 1
          %s245 = scalar_select %p244, %s26, 1
          %p246 = scmp.lt.s32.totalorder %s243, 1
          %s247 = scalar_select %p246, %s243, 1
          %s248 = smul.addr %s245, 2
          %s249 = sadd.s32 %s247, %s248
          %s250 = smul.addr %s249, 8
          %s251 = scalar_lea.vmem %s0, %s250
          %s252 = smul.u32 2, %s27
        $region20: #{tpu_custom_call.1} parent=15 // pred_fallthru
          _
        // Predicated region
        $region21: #{tpu_custom_call.1} parent=15 // pred_check
          %p253 = pneg %p81
        $region22: #{tpu_custom_call.1} parent=15 // pred_check_branch
          %255 = sbr.rel (%p253) target = $region24
        $region23: #{tpu_custom_call.1} parent=15 // pred_region
          %s256 = smul.u32 2, %s27
          %p257 = scmp.lt.s32.totalorder %s26, 1
          %s258 = scalar_select %p257, %s26, 1
          %p259 = scmp.lt.s32.totalorder %s256, 1
          %s260 = scalar_select %p259, %s256, 1
          %s261 = smul.addr %s258, 2
          %s262 = sadd.s32 %s260, %s261
          %s263 = smul.addr %s262, 8
          %s264 = scalar_lea.vmem %s1, %s263
          %s265 = smul.u32 2, %s27
        $region24: #{tpu_custom_call.1} parent=15 // pred_fallthru
          _
        // Predicated region
        $region25: #{tpu_custom_call.1} parent=15 // pred_check
          %p266 = pneg %p109
        $region26: #{tpu_custom_call.1} parent=15 // pred_check_branch
          %268 = sbr.rel (%p266) target = $region28
        $region27: #{tpu_custom_call.1} parent=15 // pred_region
          %s269 = smul.u32 2, %s27
          %p270 = scmp.lt.s32.totalorder %s26, 1
          %s271 = scalar_select %p270, %s26, 1
          %p272 = scmp.lt.s32.totalorder %s269, 1
          %s273 = scalar_select %p272, %s269, 1
          %s274 = smul.addr %s271, 2
          %s275 = sadd.s32 %s273, %s274
          %s276 = smul.addr %s275, 8
          %s277 = scalar_lea.vmem %s2, %s276
          %s278 = smul.u32 2, %s27
        $region28: #{tpu_custom_call.1} parent=15 // pred_fallthru
          _
        // Predicated region
        $region29: #{tpu_custom_call.1} parent=15 // pred_check
          %p279 = pneg %p135
        $region30: #{tpu_custom_call.1} parent=15 // pred_check_branch
          %281 = sbr.rel (%p279) target = $region32
        $region31: #{tpu_custom_call.1} parent=15 // pred_region
          %p282 = scmp.lt.s32.totalorder %s26, 1
          %s283 = scalar_select %p282, %s26, 1
          %s284 = smul.addr %s283, 21
          %s285 = smul.addr %s284, 8
          %s286 = scalar_lea.vmem %s3, %s285
        $region32: #{tpu_custom_call.1} parent=15 // pred_fallthru
          _
      $region16: #{tpu_custom_call.1} parent=5 // pred_fallthru
        _
      %p287 = scmp.le.s32.totalorder 1, %s19
      %p288 = scmp.lt.s32.totalorder %s19, 3
      %p289 = pnand %p287, %p288
      %p290 = pneg %p289
      // Predicated region
      $region33: #{tpu_custom_call.1} parent=5 // pred_check
        _
      $region34: #{tpu_custom_call.1} parent=5 // pred_check_branch
        %292 = sbr.rel (%p289) target = $region36
      $region35: #{tpu_custom_call.1} parent=5 // pred_region
        %s293 = ssub.s32 %s19, 1
        %s294 = smul.u32 2, %s29
        %p295 = scmp.lt.s32.totalorder %s28, 1
        %s296 = scalar_select %p295, %s28, 1
        %p297 = scmp.lt.s32.totalorder %s294, 1
        %s298 = scalar_select %p297, %s294, 1
        %s299 = smul.addr %s296, 2
        %s300 = sadd.s32 %s298, %s299
        %s301 = smul.addr %s300, 8
        %s302 = scalar_lea.vmem %s0, %s301
        %p303 = pneg %p59
        %p304 = pneg %p56
        %s305 = smul.u32 2, %s29
        %p306 = scmp.lt.s32.totalorder %s28, 1
        %s307 = scalar_select %p306, %s28, 1
        %p308 = scmp.lt.s32.totalorder %s305, 1
        %s309 = scalar_select %p308, %s305, 1
        %s310 = smul.addr %s307, 2
        %s311 = sadd.s32 %s309, %s310
        %s312 = smul.addr %s311, 8
        %s313 = scalar_lea.vmem %s1, %s312
        %p314 = pneg %p87
        %p315 = pneg %p84
        %s316 = smul.u32 2, %s29
        %p317 = scmp.lt.s32.totalorder %s28, 1
        %s318 = scalar_select %p317, %s28, 1
        %p319 = scmp.lt.s32.totalorder %s316, 1
        %s320 = scalar_select %p319, %s316, 1
        %s321 = smul.addr %s318, 2
        %s322 = sadd.s32 %s320, %s321
        %s323 = smul.addr %s322, 8
        %s324 = scalar_lea.vmem %s2, %s323
        %p325 = pneg %p115
        %p326 = pneg %p112
        %p327 = scmp.lt.s32.totalorder %s28, 1
        %s328 = scalar_select %p327, %s28, 1
        %s329 = smul.addr %s328, 21
        %s330 = smul.addr %s329, 8
        %s331 = scalar_lea.vmem %s3, %s330
        %p332 = pneg %p141
        %p333 = pneg %p138
        %p334 = pneg %p169
        %p335 = pneg %p166
        %s336 = sand.u32 %s156, 1
        %s337 = scalar_lea.sflag [#allocation5], %s336
        %s338 = sand.u32 %s156, 1
        %s339 = smul.addr %s338, 64
        %s340 = scalar_lea.vmem [#allocation4], %s339
        %p341 = pneg %p195
        %p342 = pneg %p192
        %s343 = sand.u32 %s24, 1
        %s344 = scalar_lea.sflag [#allocation7], %s343
        %s345 = sand.u32 %s182, 1
        %s346 = scalar_lea.vmem [#allocation6], %s345
        %p347 = pneg %p221
        %p348 = pneg %p218
        %s349 = sand.u32 %s24, 1
        %s350 = scalar_lea.sflag [#allocation7], %s349
        %s351 = sand.u32 %s208, 1
        %s352 = scalar_lea.vmem [#allocation8], %s351
        %s353 = smul.u32 2, %s29
        %p354 = scmp.lt.s32.totalorder %s28, 1
        %s355 = scalar_select %p354, %s28, 1
        %p356 = scmp.lt.s32.totalorder %s353, 1
        %s357 = scalar_select %p356, %s353, 1
        %s358 = smul.addr %s355, 2
        %s359 = sadd.s32 %s357, %s358
        %s360 = smul.addr %s359, 8
        %s361 = scalar_lea.vmem %s0, %s360
        %s362 = smul.u32 2, %s29
        %s363 = smul.u32 2, %s29
        %p364 = scmp.lt.s32.totalorder %s28, 1
        %s365 = scalar_select %p364, %s28, 1
        %p366 = scmp.lt.s32.totalorder %s363, 1
        %s367 = scalar_select %p366, %s363, 1
        %s368 = smul.addr %s365, 2
        %s369 = sadd.s32 %s367, %s368
        %s370 = smul.addr %s369, 8
        %s371 = scalar_lea.vmem %s1, %s370
        %s372 = smul.u32 2, %s29
        %s373 = smul.u32 2, %s29
        %p374 = scmp.lt.s32.totalorder %s28, 1
        %s375 = scalar_select %p374, %s28, 1
        %p376 = scmp.lt.s32.totalorder %s373, 1
        %s377 = scalar_select %p376, %s373, 1
        %s378 = smul.addr %s375, 2
        %s379 = sadd.s32 %s377, %s378
        %s380 = smul.addr %s379, 8
        %s381 = scalar_lea.vmem %s2, %s380
        %s382 = smul.u32 2, %s29
        %p383 = scmp.lt.s32.totalorder %s28, 1
        %s384 = scalar_select %p383, %s28, 1
        %s385 = smul.addr %s384, 21
        %s386 = smul.addr %s385, 8
        %s387 = scalar_lea.vmem %s3, %s386
        %s388 = smul.u32 2, %s29
        %v390 = vld [vmem:[%s361] sm:$0xff]
        %v391 = vld [vmem:[%s361 + $0x8] sm:$0xff]
        %v392 = vld [vmem:[%s371] sm:$0xff]
        %v393 = vld [vmem:[%s371 + $0x8] sm:$0xff]
        %v394 = vld [vmem:[%s381] sm:$0xff]
        %v395 = vld [vmem:[%s381 + $0x8] sm:$0xff]
        %v396 = vpack.c.bf16 %v391, %v390
        %v397 = vld [vmem:[%s387] sm:$0xff]
        %v398 = vld [vmem:[%s387 + $0x8] sm:$0xff]
        %v399 = vld [vmem:[%s387 + $0x10] sm:$0xff]
        %v400 = vld [vmem:[%s387 + $0x18] sm:$0xff]
        %v401 = vld [vmem:[%s387 + $0x20] sm:$0xff]
        %v402 = vld [vmem:[%s387 + $0x28] sm:$0xff]
        %v403 = vld [vmem:[%s387 + $0x30] sm:$0xff]
        %v404 = vld [vmem:[%s387 + $0x38] sm:$0xff]
        %v405 = vld [vmem:[%s387 + $0x40] sm:$0xff]
        %v406 = vld [vmem:[%s387 + $0x48] sm:$0xff]
        %v407 = vld [vmem:[%s387 + $0x50] sm:$0xff]
        %v408 = vld [vmem:[%s387 + $0x58] sm:$0xff]
        %v409 = vld [vmem:[%s387 + $0x60] sm:$0xff]
        %v410 = vld [vmem:[%s387 + $0x68] sm:$0xff]
        %v411 = vld [vmem:[%s387 + $0x70] sm:$0xff]
        %v412 = vld [vmem:[%s387 + $0x78] sm:$0xff]
        %v413 = vld [vmem:[%s387 + $0x80] sm:$0xff]
        %v414 = vld [vmem:[%s387 + $0x88] sm:$0xff]
        %v415 = vld [vmem:[%s387 + $0x90] sm:$0xff]
        %v416 = vld [vmem:[%s387 + $0x98] sm:$0xff]
        %v417 = vld [vmem:[%s387 + $0xa0] sm:$0xff]
        %v418 = vpack.c.bf16 %v398, %v397
        %v419 = vpack.c.bf16 %v400, %v399
        %v420 = vpack.c.bf16 %v402, %v401
        %v421 = vpack.c.bf16 %v404, %v403
        %v422 = vpack.c.bf16 %v406, %v405
        %v423 = vpack.c.bf16 %v408, %v407
        %v424 = vpack.c.bf16 %v410, %v409
        %v425 = vpack.c.bf16 %v412, %v411
        %v426 = vpack.c.bf16 %v414, %v413
        %v427 = vpack.c.bf16 %v416, %v415
        %v428 = vpack.c.bf16 %v417, %v417
        %vm429 = vcmask 261120
        %v431 = vsel %vm429, %v396, 0
        %v434 = vsel %vm429, %v418, 0
        %v437 = vsel %vm429, %v419, 0
        %v440 = vsel %vm429, %v420, 0
        %v443 = vsel %vm429, %v421, 0
        %v446 = vsel %vm429, %v422, 0
        %v449 = vsel %vm429, %v423, 0
        %v452 = vsel %vm429, %v424, 0
        %v455 = vsel %vm429, %v425, 0
        %v458 = vsel %vm429, %v426, 0
        %v461 = vsel %vm429, %v427, 0
        %v464 = vsel %vm429, %v428, 0
        %466 = vmatprep.subr.bf16.mxu0 0
        %467 = vmatpush1.bf16.xpose.msra.mxu0 %v434
        %468 = vmatprep.subr.bf16.mxu0 0
        %469 = vmatpush1.bf16.xpose.msra.mxu0 %v437
        %470 = vmatprep.subr.bf16.mxu0 0
        %471 = vmatpush1.bf16.xpose.msra.mxu0 %v440
        %472 = vmatprep.subr.bf16.mxu0 0
        %473 = vmatpush1.bf16.xpose.msra.mxu0 %v443
        %474 = vmatprep.subr.bf16.mxu0 0
        %475 = vmatpush1.bf16.xpose.msra.mxu0 %v446
        %476 = vmatprep.subr.bf16.mxu0 0
        %477 = vmatpush1.bf16.xpose.msra.mxu0 %v449
        %478 = vmatprep.subr.bf16.mxu0 0
        %479 = vmatpush1.bf16.xpose.msra.mxu0 %v452
        %480 = vmatprep.subr.bf16.mxu0 0
        %481 = vmatpush1.bf16.xpose.msra.mxu0 %v455
        %482 = vmatprep.subr.bf16.mxu0 0
        %483 = vmatpush1.bf16.xpose.msra.mxu0 %v458
        %484 = vmatprep.subr.bf16.mxu0 0
        %485 = vmatpush1.bf16.xpose.msra.mxu0 %v461
        %486 = vmatprep.subr.bf16.mxu0 0
        %487 = vmatpush1.bf16.xpose.msra.mxu0 %v464
        %488 = vmatprep.subr.bf16.mxu0 0
        %489 = vmatpush1.bf16.xpose.msra.mxu0 0
        %490 = vmatprep.subr.bf16.mxu0 0
        %491 = vmatpush1.bf16.xpose.msra.mxu0 0
        %492 = vmatprep.subr.bf16.mxu0 0
        %493 = vmatpush1.bf16.xpose.msra.mxu0 0
        %494 = vmatprep.subr.bf16.mxu0 0
        %495 = vmatpush1.bf16.xpose.msra.mxu0 0
        %496 = vmatprep.subr.bf16.mxu0 0
        %497 = vmatpush1.bf16.xpose.msra.mxu0 0
        %498 = vmatprep.mubr.bf16.mxu0 0
        %499 = vmatmul.mubr.bf16.gmra.mrb[0].mxu0 %v431
        %v500 = vpop.f32.mrb[0].mxu0
        %v501 = vadd.f32 0.0, %v500
        %v502 = vpop.f32.mrb[0].mxu0
        %v503 = vadd.f32 0.0, %v502
        %v504 = vpop.f32.mrb[0].mxu0
        %v505 = vadd.f32 0.0, %v504
        %v506 = vpop.f32.mrb[0].mxu0
        %v507 = vadd.f32 0.0, %v506
        %508 = vdwg.mxu0
        %vm509 = vcmp.gt.f32.partialorder %v392, 0.0
        %vm510 = vcmp.gt.f32.partialorder %v393, 0.0
        %v511 = vsel %vm509, 1, 0
        %v512 = vsel %vm510, 1, 0
        %513 = vset.pattern.permute.xlu0 0
        %514 = vperm.xlu0 %513, %v511
        %v515 = vpop.permute.xlu0 %514
        %516 = vset.pattern.permute.xlu0 0
        %517 = vperm.xlu0 %516, %v512
        %v518 = vpop.permute.xlu0 %517
        %vm519 = vcmp.eq.s32.totalorder %v515, 1
        %vm520 = vcmp.eq.s32.totalorder %v518, 1
        %v521 = vsel %vm519, %v501, 1e+30
        %v522 = vsel %vm519, %v503, 1e+30
        %v523 = vsel %vm520, %v505, 1e+30
        %v524 = vsel %vm520, %v507, 1e+30
        %525 = vst [vmem:[%s340] sm:$0xff] %v521
        %vm526 = vcmask 326656
        %527 = vst.msk [vmem:[%s340 + $0x8] sm:$0xff] %vm526, %v522
        %528 = vst [vmem:[%s340 + $0x10] sm:$0xff] %v523
        %529 = vst.msk [vmem:[%s340 + $0x18] sm:$0xff] %vm526, %v524
        %vm530 = vcmp.gt.f32.partialorder %v394, 0.0
        %vm531 = vcmp.gt.f32.partialorder %v395, 0.0
        %v532 = vsel %vm530, 1, 0
        %v533 = vsel %vm531, 1, 0
        %534 = vset.pattern.permute.xlu0 0
        %535 = vperm.xlu0 %534, %v532
        %v536 = vpop.permute.xlu0 %535
        %537 = vset.pattern.permute.xlu0 0
        %538 = vperm.xlu0 %537, %v533
        %v539 = vpop.permute.xlu0 %538
        %vm540 = vcmp.eq.s32.totalorder %v536, 1
        %vm541 = vcmp.eq.s32.totalorder %v539, 1
        %v542 = vsel %vm540, %v501, 1e+30
        %v543 = vsel %vm540, %v503, 1e+30
        %v544 = vsel %vm541, %v505, 1e+30
        %v545 = vsel %vm541, %v507, 1e+30
        %s546 = scalar_lea.vmem %s340, 32 [#allocation4]
        %547 = vst [vmem:[%s546] sm:$0xff] %v542
        %548 = vst.msk [vmem:[%s546 + $0x8] sm:$0xff] %vm526, %v543
        %549 = vst [vmem:[%s546 + $0x10] sm:$0xff] %v544
        %550 = vst.msk [vmem:[%s546 + $0x18] sm:$0xff] %vm526, %v545
        %p551 = scmp.eq.s32.totalorder %s29, 0
        // Predicated region
        $region37: #{tpu_custom_call.1} parent=35 // pred_check
          %p552 = pneg %p551
        $region38: #{tpu_custom_call.1} parent=35 // pred_check_branch
          %554 = sbr.rel (%p552) target = $region40
        $region39: #{tpu_custom_call.1} parent=35 // pred_region
          %vm555 = vcmask 254976
          %556 = vst.msk [vmem:[#allocation2] sm:$0x3] %vm555, 0.0
          %vm557 = vcmask 1024
          %558 = vst.msk [vmem:[#allocation3] sm:$0x3] %vm557, 0.0
          %vm559 = vcmask 253952
          %560 = vst.msk [vmem:[%s346] sm:$0x1] %vm559, %v390
        $region40: #{tpu_custom_call.1} parent=35 // pred_fallthru
          _
        %v561 = vld [vmem:[#allocation2] sm:$0x1]
        %563 = vset.pattern.permute.xlu0 0
        %564 = vperm.xlu0 %563, %v392
        %v565 = vpop.permute.xlu0 %564
        %568 = vset.pattern.permute.xlu0 0
        %569 = vperm.xlu0 %568, %v393
        %v570 = vpop.permute.xlu0 %569
        %v572 = vmul.f32 %v390, %v565
        %v573 = vmul.f32 %v391, %v570
        %v574 = vsel %vm429, %v572, 0.0
        %v575 = vsel %vm429, %v573, 0.0
        %v576 = vadd.f32 %v574, %v575
        %v577 = vrot.slane %v576, 4
        %v578 = vadd.f32 %v576, %v577
        %v579 = vrot.slane %v578, 2
        %v580 = vadd.f32 %v578, %v579
        %v581 = vrot.slane %v580, 1
        %v582 = vadd.f32 %v580, %v581
        %v583 = vadd.f32 %v561, %v582
        %vm584 = vcmask 253952
        %585 = vst.msk [vmem:[#allocation2] sm:$0x1] %vm584, %v583
        %v586 = vld [vmem:[#allocation2 + $0x1] sm:$0x1]
        %588 = vset.pattern.permute.xlu0 0
        %589 = vperm.xlu0 %588, %v394
        %v590 = vpop.permute.xlu0 %589
        %593 = vset.pattern.permute.xlu0 0
        %594 = vperm.xlu0 %593, %v395
        %v595 = vpop.permute.xlu0 %594
        %v597 = vmul.f32 %v390, %v590
        %v598 = vmul.f32 %v391, %v595
        %v599 = vsel %vm429, %v597, 0.0
        %v600 = vsel %vm429, %v598, 0.0
        %v601 = vadd.f32 %v599, %v600
        %v602 = vrot.slane %v601, 4
        %v603 = vadd.f32 %v601, %v602
        %v604 = vrot.slane %v603, 2
        %v605 = vadd.f32 %v603, %v604
        %v606 = vrot.slane %v605, 1
        %v607 = vadd.f32 %v605, %v606
        %v608 = vadd.f32 %v586, %v607
        %609 = vst.msk [vmem:[#allocation2 + $0x1] sm:$0x1] %vm584, %v608
        %v610 = vld [vmem:[#allocation3] sm:$0x1]
        %vm611 = vcmask 7168
        %v612 = vsel %vm611, %v392, 0.0
        %v613 = vsel %vm611, %v393, 0.0
        %v614 = vadd.f32 %v612, %v613
        %v615 = vrot.slane %v614, 4
        %v616 = vadd.f32 %v614, %v615
        %v617 = vrot.slane %v616, 2
        %v618 = vadd.f32 %v616, %v617
        %v619 = vrot.slane %v618, 1
        %v620 = vadd.f32 %v618, %v619
        %v621 = vadd.f32 %v610, %v620
        %vm622 = vcmask 0
        %623 = vst.msk [vmem:[#allocation3] sm:$0x1] %vm622, %v621
        %v624 = vld [vmem:[#allocation3 + $0x1] sm:$0x1]
        %v625 = vsel %vm611, %v394, 0.0
        %v626 = vsel %vm611, %v395, 0.0
        %v627 = vadd.f32 %v625, %v626
        %v628 = vrot.slane %v627, 4
        %v629 = vadd.f32 %v627, %v628
        %v630 = vrot.slane %v629, 2
        %v631 = vadd.f32 %v629, %v630
        %v632 = vrot.slane %v631, 1
        %v633 = vadd.f32 %v631, %v632
        %v634 = vadd.f32 %v624, %v633
        %635 = vst.msk [vmem:[#allocation3 + $0x1] sm:$0x1] %vm622, %v634
        // Predicated region
        $region41: #{tpu_custom_call.1} parent=35 // pred_check
          %p636 = pneg %p551
        $region42: #{tpu_custom_call.1} parent=35 // pred_check_branch
          %638 = sbr.rel (%p636) target = $region44
        $region43: #{tpu_custom_call.1} parent=35 // pred_region
          %v639 = vld [vmem:[#allocation3] sm:$0x1]
          %v640 = vmax.f32 %v639, 1.0
          %v641 = vld [vmem:[#allocation3 + $0x1] sm:$0x1]
          %v642 = vmax.f32 %v641, 1.0
          %v643 = vld [vmem:[#allocation2] sm:$0x1]
          %645 = vset.pattern.permute.xlu0 0
          %646 = vperm.xlu0 %645, %v640
          %v647 = vpop.permute.xlu0 %646
          %v649 = vrcp.pop %v647
          %v650 = vmul.f32 %v643, %v649
          %v651 = vld [vmem:[#allocation2 + $0x1] sm:$0x1]
          %653 = vset.pattern.permute.xlu0 0
          %654 = vperm.xlu0 %653, %v642
          %v655 = vpop.permute.xlu0 %654
          %v657 = vrcp.pop %v655
          %v658 = vmul.f32 %v651, %v657
          %v659 = vsub.f32 %v650, %v658
          %660 = vst.msk [vmem:[%s352] sm:$0x1] %vm584, %v659
        $region44: #{tpu_custom_call.1} parent=35 // pred_fallthru
          _
        %s661 = sand.u32 %s156, 1
        %s662 = scalar_lea.sflag [#allocation5], %s661
        %s663 = sand.u32 %s156, 1
        %s664 = smul.addr %s663, 64
        %s665 = scalar_lea.vmem [#allocation4], %s664
        %s666 = sand.u32 %s24, 1
        %s667 = scalar_lea.sflag [#allocation7], %s666
        %s668 = sand.u32 %s182, 1
        %s669 = scalar_lea.vmem [#allocation6], %s668
        %s670 = sand.u32 %s24, 1
        %s671 = scalar_lea.sflag [#allocation7], %s670
        %s672 = sand.u32 %s208, 1
        %s673 = scalar_lea.vmem [#allocation8], %s672
        // Predicated region
        $region45: #{tpu_custom_call.1} parent=35 // pred_check
          %p674 = pneg %p166
        $region46: #{tpu_custom_call.1} parent=35 // pred_check_branch
          %676 = sbr.rel (%p674) target = $region48
        $region47: #{tpu_custom_call.1} parent=35 // pred_region
          %s677 = smul.u32 2, %s29
          %s679 = ssub.s32 1024, 1024
          %680 = vsyncadd %s662, %s679
          %s681 = smul.addr %s677, 2
          %s682 = smul.addr %s28, 8
          %s683 = sadd.s32 %s681, %s682
          %s684 = smul.addr %s683, 128
          %s685 = scalar_lea.hbm %s4, %s684
          %s686 = sshll.u32 %s665, 4
          %s687 = int_to_ptr.vmem [resolvable:$true] %s686
          %692 = dma.vmem_to_hbm [thread:$0]  %s687, 1024, %s685, %s662, 256, 256, 16
        $region48: #{tpu_custom_call.1} parent=35 // pred_fallthru
          _
        // Predicated region
        $region49: #{tpu_custom_call.1} parent=35 // pred_check
          %p693 = pneg %p192
        $region50: #{tpu_custom_call.1} parent=35 // pred_check_branch
          %695 = sbr.rel (%p693) target = $region52
        $region51: #{tpu_custom_call.1} parent=35 // pred_region
          %s697 = ssub.s32 16, 16
          %698 = vsyncadd %s667, %s697
          %s699 = smul.addr %s28, 16
          %s700 = scalar_lea.hbm %s5, %s699
          %s702 = sshll.u32 %s669, 4
          %s703 = int_to_ptr.vmem [resolvable:$true] %s702
          %705 = dma.vmem_to_hbm [thread:$0]  %s703, 16, %s700, %s667
        $region52: #{tpu_custom_call.1} parent=35 // pred_fallthru
          _
        // Predicated region
        $region53: #{tpu_custom_call.1} parent=35 // pred_check
          %p706 = pneg %p218
        $region54: #{tpu_custom_call.1} parent=35 // pred_check_branch
          %708 = sbr.rel (%p706) target = $region56
        $region55: #{tpu_custom_call.1} parent=35 // pred_region
          %s710 = ssub.s32 16, 16
          %711 = vsyncadd %s671, %s710
          %s712 = smul.addr %s28, 16
          %s713 = scalar_lea.hbm %s6, %s712
          %s715 = sshll.u32 %s673, 4
          %s716 = int_to_ptr.vmem [resolvable:$true] %s715
          %718 = dma.vmem_to_hbm [thread:$0]  %s716, 16, %s713, %s671
        $region56: #{tpu_custom_call.1} parent=35 // pred_fallthru
          _
      $region36: #{tpu_custom_call.1} parent=5 // pred_fallthru
        _
      %p719 = scmp.le.s32.totalorder 2, %s19
      // Predicated region
      $region57: #{tpu_custom_call.1} parent=5 // pred_check
        %p720 = pneg %p719
      $region58: #{tpu_custom_call.1} parent=5 // pred_check_branch
        %722 = sbr.rel (%p720) target = $region60
      $region59: #{tpu_custom_call.1} parent=5 // pred_region
        %s723 = ssub.s32 %s19, 2
        // Predicated region
        $region61: #{tpu_custom_call.1} parent=59 // pred_check
          %p724 = pneg %p172
        $region62: #{tpu_custom_call.1} parent=59 // pred_check_branch
          %726 = sbr.rel (%p724) target = $region64
        $region63: #{tpu_custom_call.1} parent=59 // pred_region
          %s727 = sand.u32 %s157, 1
          %s728 = scalar_lea.sflag [#allocation5], %s727
          %s729 = sand.u32 %s157, 1
          %s730 = smul.addr %s729, 64
          %s731 = scalar_lea.vmem [#allocation4], %s730
          %732 = dma.done %s728, 1024
        $region64: #{tpu_custom_call.1} parent=59 // pred_fallthru
          _
        // Predicated region
        $region65: #{tpu_custom_call.1} parent=59 // pred_check
          %p733 = pneg %p198
        $region66: #{tpu_custom_call.1} parent=59 // pred_check_branch
          %735 = sbr.rel (%p733) target = $region68
        $region67: #{tpu_custom_call.1} parent=59 // pred_region
          %s736 = sand.u32 %s25, 1
          %s737 = scalar_lea.sflag [#allocation7], %s736
          %s738 = sand.u32 %s183, 1
          %s739 = scalar_lea.vmem [#allocation6], %s738
          %740 = dma.done %s737, 16
        $region68: #{tpu_custom_call.1} parent=59 // pred_fallthru
          _
        // Predicated region
        $region69: #{tpu_custom_call.1} parent=59 // pred_check
          %p741 = pneg %p224
        $region70: #{tpu_custom_call.1} parent=59 // pred_check_branch
          %743 = sbr.rel (%p741) target = $region72
        $region71: #{tpu_custom_call.1} parent=59 // pred_region
          %s744 = sand.u32 %s25, 1
          %s745 = scalar_lea.sflag [#allocation7], %s744
          %s746 = sand.u32 %s209, 1
          %s747 = scalar_lea.vmem [#allocation8], %s746
          %748 = dma.done %s745, 16
        $region72: #{tpu_custom_call.1} parent=59 // pred_fallthru
          _
      $region60: #{tpu_custom_call.1} parent=5 // pred_fallthru
        _
    $region6: #{tpu_custom_call.1} parent=1 // loop_footer
      %s23 = sadd.s32 1, %s19
    $region7: #{tpu_custom_call.1} parent=1 // loop_footer_branch
      %18 = sbr.rel target = $region3
    $region8: #{tpu_custom_call.1} parent=1 // loop_exit
      _
    %749 = vsyncpa [#allocation5], 1
    %s750 = scalar_lea.sflag [#allocation5], 1
    %751 = vsyncpa %s750, 1
    %752 = vsyncpa [#allocation7], 1
    %s753 = scalar_lea.sflag [#allocation7], 1
    %754 = vsyncpa %s753, 1

</llo_original>
